<compile_context>
chip_gen: v7x
topology: tpu7x:2x2x1
jax: 0.10.0
libtpu: 0.0.40
codegen_flags: <defaults>
</compile_context>

<pallas_src>
import math

import jax
import jax.numpy as jnp
from jax.experimental import pallas as pl
from jax.experimental.pallas import tpu as pltpu

# TODO(synk): the reference `Prior` class is not provided; a zero-mean,
# unit-variance Gaussian prior is assumed for lpw (the usual Bayes-by-Backprop
# default).  Adjust PRIOR_STD if the real prior differs (scale mixtures need a
# different lpw term entirely).
PRIOR_STD = 1.0
_LOG_PRIOR_STD = math.log(PRIOR_STD)                 # == 0.0 for PRIOR_STD == 1
_INV_2VAR_PRIOR = 0.5 / (PRIOR_STD * PRIOR_STD)


def _softplus_thresh20(z):
    # torch.nn.functional.softplus(z, beta=1, threshold=20)
    return jnp.where(z > 20.0, z, jnp.log1p(jnp.exp(jnp.minimum(z, 20.0))))


def bayesian_layer_kernel(x_ref, wm_ref, ws_ref, bm_ref, bs_ref,
                          epsw_ref, epsb_ref,
                          out_ref, klp_ref):
    x = x_ref[...]                 # (B, In)   resident across tiles
    W_mean = wm_ref[...]           # (In, T)
    W_spread = ws_ref[...]         # (In, T)
    b_mean = bm_ref[...]           # (1, T)
    b_spread = bs_ref[...]         # (1, T)
    eps_W = epsw_ref[...]          # (In, T)
    eps_b = epsb_ref[...]          # (1, T)

    # One softplus/log chain per element feeds both the matmul operand and the
    # fused KL expression (no duplicate transcendental passes).
    std_w = 1e-6 + _softplus_thresh20(W_spread)
    std_b = 1e-6 + _softplus_thresh20(b_spread)
    weights = W_mean + std_w * eps_W               # reparameterised sample
    bias = b_mean + std_b * eps_b

    # output = x @ weights + bias  (bias broadcast over batch, lane-dense tile)
    out_ref[...] = (jnp.dot(x, weights, preferred_element_type=jnp.float32)
                    + bias)

    # Fused per-lane KL contribution of this tile:
    #   lqw_elem - lpw_elem
    #     = -log(std) - 0.5*eps^2 + log(prior_std) + w^2/(2*prior_std^2)
    # (-0.5*log(2*pi) terms cancel exactly.)  Reduce only over the sublane (In)
    # axis here; the cross-lane sum is finished in the wrapper.
    kl_w_elem = (-jnp.log(std_w) - 0.5 * (eps_W * eps_W)
                 + _INV_2VAR_PRIOR * (weights * weights))
    kl_b_elem = (-jnp.log(std_b) - 0.5 * (eps_b * eps_b)
                 + _INV_2VAR_PRIOR * (bias * bias))
    in_units = W_mean.shape[0]
    kl_lane = (jnp.sum(kl_w_elem, axis=0, keepdims=True) + kl_b_elem
               + (in_units + 1) * _LOG_PRIOR_STD)          # (1, T)
    klp_ref[...] = kl_lane.reshape(klp_ref.shape)


def _choose_tile_out(out_padded: int) -> int:
    """out_padded is a multiple of 128.  Prefer >=2 tiles (v7x has 2 TCs per
    chip), tiles capped at 512 lanes."""
    if out_padded <= 128:
        return out_padded
    for cand in (512, 384, 256, 128):
        if out_padded % cand == 0 and out_padded // cand >= 2:
            return cand
    for cand in (512, 384, 256, 128):
        if out_padded % cand == 0:
            return cand
    return 128


def bayesian_layer_forward(x, W_mean, W_spread, b_mean, b_spread, eps_W, eps_b):
    """Forward pass of BayesianLayer.

    x: (B, In) f32; W_*: (In, Out) f32; b_*: (Out,) f32;
    eps_W: (In, Out) f32; eps_b: (Out,) f32 (fresh N(0,1) draws per call).
    Returns (output (B, Out) f32, kl = lqw - lpw scalar f32).
    """
    x = jnp.asarray(x, jnp.float32)
    B, In = x.shape
    Out = W_mean.shape[1]

    # Lane-dense padding of the output-units axis (unmasked vst stores);
    # padded columns are sliced off / excluded from the KL below.
    Out_p = ((Out + 127) // 128) * 128
    pad = Out_p - Out

    def pad_cols(a):
        a = jnp.asarray(a, jnp.float32).reshape(-1, Out)
        return jnp.pad(a, ((0, 0), (0, pad))) if pad else a

    wm, ws = pad_cols(W_mean), pad_cols(W_spread)
    bm, bs = pad_cols(b_mean), pad_cols(b_spread)
    ew, eb = pad_cols(eps_W), pad_cols(eps_b)

    T = _choose_tile_out(Out_p)
    n_tiles = Out_p // T

    out, klp = pl.pallas_call(
        bayesian_layer_kernel,
        grid_spec=pltpu.PrefetchScalarGridSpec(
            num_scalar_prefetch=0,
            grid=(n_tiles,),
            in_specs=[
                pl.BlockSpec((B, In), lambda j: (0, 0)),   # x (resident)
                pl.BlockSpec((In, T), lambda j: (0, j)),   # W_mean
                pl.BlockSpec((In, T), lambda j: (0, j)),   # W_spread
                pl.BlockSpec((1, T), lambda j: (0, j)),    # b_mean
                pl.BlockSpec((1, T), lambda j: (0, j)),    # b_spread
                pl.BlockSpec((In, T), lambda j: (0, j)),   # eps_W
                pl.BlockSpec((1, T), lambda j: (0, j)),    # eps_b
            ],
            out_specs=(
                pl.BlockSpec((B, T), lambda j: (0, j)),        # output
                pl.BlockSpec((1, 1, T), lambda j: (j, 0, 0)),  # KL lane partials
            ),
        ),
        out_shape=(
            jax.ShapeDtypeStruct((B, Out_p), jnp.float32),
            jax.ShapeDtypeStruct((n_tiles, 1, T), jnp.float32),
        ),
        compiler_params=pltpu.CompilerParams(
            dimension_semantics=("parallel",),
            vmem_limit_bytes=32 * 1024 * 1024),
    )(x, wm, ws, bm, bs, ew, eb)

    # klp flattened is in output-column order; drop padded lanes, then sum.
    kl = jnp.sum(klp.reshape(-1)[:Out])
    return out[:, :Out], kl


def _reference_forward(x, W_mean, W_spread, b_mean, b_spread, eps_W, eps_b):
    """Pure-jnp transcription of the torch module (same eps), for validation."""
    std_w = 1e-6 + _softplus_thresh20(W_spread)
    std_b = 1e-6 + _softplus_thresh20(b_spread)
    weights = W_mean + std_w * eps_W
    bias = b_mean + std_b * eps_b
    output = x @ weights + bias[None, :]

    def log_gauss(v, mean, std):
        return (-jnp.log(std) - 0.5 * math.log(2.0 * math.pi)
                - (v - mean) ** 2 / (2.0 * std ** 2))

    lqw = (jnp.sum(log_gauss(weights, W_mean, std_w))
           + jnp.sum(log_gauss(bias, b_mean, std_b)))
    lpw = (jnp.sum(log_gauss(weights, 0.0, PRIOR_STD))
           + jnp.sum(log_gauss(bias, 0.0, PRIOR_STD)))
    return output, lqw - lpw


if __name__ == "__main__":
    batch, input_units, output_units = 8, 32, 256

    key = jax.random.PRNGKey(0)
    k_x, k_wm, k_ws, k_bm, k_bs, k_ew, k_eb = jax.random.split(key, 7)

    # Deterministic parameter init matching the module's __init__ ranges.
    W_mean = jax.random.uniform(k_wm, (input_units, output_units),
                                jnp.float32, -0.1, 0.1)
    W_spread = jax.random.uniform(k_ws, (input_units, output_units),
                                  jnp.float32, -3.0, -2.0)
    b_mean = jax.random.uniform(k_bm, (output_units,), jnp.float32, -0.1, 0.1)
    b_spread = jax.random.uniform(k_bs, (output_units,), jnp.float32, -3.0, -2.0)
    x = jax.random.normal(k_x, (batch, input_units), jnp.float32)

    # eps drawn fresh per forward call (mirrors torch's .normal_()); drawn on the
    # host side so the kernel contains no TPU-only PRNG primitives.
    eps_W = jax.random.normal(k_ew, (input_units, output_units), jnp.float32)
    eps_b = jax.random.normal(k_eb, (output_units,), jnp.float32)

    out, kl = bayesian_layer_forward(x, W_mean, W_spread, b_mean, b_spread,
                                     eps_W, eps_b)
    jax.block_until_ready((out, kl))

    ref_out, ref_kl = _reference_forward(x, W_mean, W_spread, b_mean, b_spread,
                                         eps_W, eps_b)

    assert out.shape == (batch, output_units)
    assert kl.shape == ()
    assert bool(jnp.all(jnp.isfinite(out)))
    assert bool(jnp.isfinite(kl))
    assert bool(jnp.allclose(out, ref_out, rtol=2e-3, atol=2e-3)), "output mismatch"
    assert bool(jnp.allclose(kl, ref_kl, rtol=1e-3, atol=1.0)), "KL mismatch"
    print("KERNEL_OK")
</pallas_src>

<mosaic_0001>
module attributes {stable_mosaic.version = 11 : i64} {
  func.func @bayesian_layer_kernel(%arg0: i32, %arg1: memref<8x32xf32, #tpu.memory_space<vmem>>, %arg2: memref<32x128xf32, #tpu.memory_space<vmem>>, %arg3: memref<32x128xf32, #tpu.memory_space<vmem>>, %arg4: memref<1x128xf32, #tpu.memory_space<vmem>>, %arg5: memref<1x128xf32, #tpu.memory_space<vmem>>, %arg6: memref<32x128xf32, #tpu.memory_space<vmem>>, %arg7: memref<1x128xf32, #tpu.memory_space<vmem>>, %arg8: memref<8x128xf32, #tpu.memory_space<vmem>>, %arg9: memref<1x1x128xf32, #tpu.memory_space<vmem>>) attributes {dimension_semantics = [#tpu.dimension_semantics<parallel>], iteration_bounds = array<i64: 2>, scalar_prefetch = 0 : i64, scratch_operands = 0 : i64, tpu.core_type = #tpu.core_type<tc>, window_params = [{pipeline_mode = #tpu.pipeline_mode<synchronous>, transform_indices = @transform_0, window_bounds = array<i64: 8, 32>}, {transform_indices = @transform_1, window_bounds = array<i64: 32, 128>}, {transform_indices = @transform_2, window_bounds = array<i64: 32, 128>}, {transform_indices = @transform_3, window_bounds = array<i64: 1, 128>}, {transform_indices = @transform_4, window_bounds = array<i64: 1, 128>}, {transform_indices = @transform_5, window_bounds = array<i64: 32, 128>}, {transform_indices = @transform_6, window_bounds = array<i64: 1, 128>}, {transform_indices = @transform_7, window_bounds = array<i64: 8, 128>}, {transform_indices = @transform_8, window_bounds = array<i64: 1, 1, 128>}]} {
    %c0 = arith.constant 0 : index
    %c0_0 = arith.constant 0 : index
    %0 = vector.load %arg1[%c0, %c0_0] : memref<8x32xf32, #tpu.memory_space<vmem>>, vector<8x32xf32>
    %c0_1 = arith.constant 0 : index
    %c0_2 = arith.constant 0 : index
    %1 = vector.load %arg2[%c0_1, %c0_2] : memref<32x128xf32, #tpu.memory_space<vmem>>, vector<32x128xf32>
    %c0_3 = arith.constant 0 : index
    %c0_4 = arith.constant 0 : index
    %2 = vector.load %arg3[%c0_3, %c0_4] : memref<32x128xf32, #tpu.memory_space<vmem>>, vector<32x128xf32>
    %c0_5 = arith.constant 0 : index
    %c0_6 = arith.constant 0 : index
    %3 = vector.load %arg4[%c0_5, %c0_6] : memref<1x128xf32, #tpu.memory_space<vmem>>, vector<1x128xf32>
    %c0_7 = arith.constant 0 : index
    %c0_8 = arith.constant 0 : index
    %4 = vector.load %arg5[%c0_7, %c0_8] : memref<1x128xf32, #tpu.memory_space<vmem>>, vector<1x128xf32>
    %c0_9 = arith.constant 0 : index
    %c0_10 = arith.constant 0 : index
    %5 = vector.load %arg6[%c0_9, %c0_10] : memref<32x128xf32, #tpu.memory_space<vmem>>, vector<32x128xf32>
    %c0_11 = arith.constant 0 : index
    %c0_12 = arith.constant 0 : index
    %6 = vector.load %arg7[%c0_11, %c0_12] : memref<1x128xf32, #tpu.memory_space<vmem>>, vector<1x128xf32>
    %cst = arith.constant 2.000000e+01 : f32
    %7 = vector.broadcast %cst : f32 to vector<32x128xf32>
    %8 = arith.cmpf ogt, %2, %7 : vector<32x128xf32>
    %cst_13 = arith.constant 2.000000e+01 : f32
    %9 = vector.broadcast %cst_13 : f32 to vector<32x128xf32>
    %10 = arith.minimumf %2, %9 : vector<32x128xf32>
    %11 = math.exp %10 : vector<32x128xf32>
    %12 = math.log1p %11 : vector<32x128xf32>
    %13 = arith.select %8, %2, %12 : vector<32x128xi1>, vector<32x128xf32>
    %cst_14 = arith.constant 9.99999997E-7 : f32
    %14 = vector.broadcast %cst_14 : f32 to vector<32x128xf32>
    %15 = arith.addf %14, %13 : vector<32x128xf32>
    %cst_15 = arith.constant 2.000000e+01 : f32
    %16 = vector.broadcast %cst_15 : f32 to vector<1x128xf32>
    %17 = arith.cmpf ogt, %4, %16 : vector<1x128xf32>
    %cst_16 = arith.constant 2.000000e+01 : f32
    %18 = vector.broadcast %cst_16 : f32 to vector<1x128xf32>
    %19 = arith.minimumf %4, %18 : vector<1x128xf32>
    %20 = math.exp %19 : vector<1x128xf32>
    %21 = math.log1p %20 : vector<1x128xf32>
    %22 = arith.select %17, %4, %21 : vector<1x128xi1>, vector<1x128xf32>
    %cst_17 = arith.constant 9.99999997E-7 : f32
    %23 = vector.broadcast %cst_17 : f32 to vector<1x128xf32>
    %24 = arith.addf %23, %22 : vector<1x128xf32>
    %25 = arith.mulf %15, %5 : vector<32x128xf32>
    %26 = arith.addf %1, %25 : vector<32x128xf32>
    %27 = arith.mulf %24, %6 : vector<1x128xf32>
    %28 = arith.addf %3, %27 : vector<1x128xf32>
    %cst_18 = arith.constant dense<0.000000e+00> : vector<8x128xf32>
    %29 = tpu.matmul %0, %26, %cst_18 {dimension_numbers = #tpu.dot_dimension_numbers<[1], [0], [0], [1], [0, 0, 1, 1], [], []>} : vector<8x32xf32>, vector<32x128xf32>, vector<8x128xf32> -> vector<8x128xf32>
    %30 = vector.broadcast %28 : vector<1x128xf32> to vector<8x128xf32>
    %31 = arith.addf %29, %30 : vector<8x128xf32>
    %c0_19 = arith.constant 0 : index
    %c0_20 = arith.constant 0 : index
    %32 = vector.load %arg8[%c0_19, %c0_20] : memref<8x128xf32, #tpu.memory_space<vmem>>, vector<8x128xf32>
    tpu.vector_store %arg8[%c0_19, %c0_20], %31 {strides = array<i32>} : memref<8x128xf32, #tpu.memory_space<vmem>>, vector<8x128xf32>,
    %33 = math.log %15 : vector<32x128xf32>
    %cst_21 = arith.constant 0.000000e+00 : f32
    %34 = vector.broadcast %cst_21 : f32 to vector<32x128xf32>
    %35 = arith.subf %34, %33 : vector<32x128xf32>
    %36 = arith.mulf %5, %5 : vector<32x128xf32>
    %cst_22 = arith.constant 5.000000e-01 : f32
    %37 = vector.broadcast %cst_22 : f32 to vector<32x128xf32>
    %38 = arith.mulf %37, %36 : vector<32x128xf32>
    %39 = arith.subf %35, %38 : vector<32x128xf32>
    %40 = arith.mulf %26, %26 : vector<32x128xf32>
    %cst_23 = arith.constant 5.000000e-01 : f32
    %41 = vector.broadcast %cst_23 : f32 to vector<32x128xf32>
    %42 = arith.mulf %41, %40 : vector<32x128xf32>
    %43 = arith.addf %39, %42 : vector<32x128xf32>
    %44 = math.log %24 : vector<1x128xf32>
    %cst_24 = arith.constant 0.000000e+00 : f32
    %45 = vector.broadcast %cst_24 : f32 to vector<1x128xf32>
    %46 = arith.subf %45, %44 : vector<1x128xf32>
    %47 = arith.mulf %6, %6 : vector<1x128xf32>
    %cst_25 = arith.constant 5.000000e-01 : f32
    %48 = vector.broadcast %cst_25 : f32 to vector<1x128xf32>
    %49 = arith.mulf %48, %47 : vector<1x128xf32>
    %50 = arith.subf %46, %49 : vector<1x128xf32>
    %51 = arith.mulf %28, %28 : vector<1x128xf32>
    %cst_26 = arith.constant 5.000000e-01 : f32
    %52 = vector.broadcast %cst_26 : f32 to vector<1x128xf32>
    %53 = arith.mulf %52, %51 : vector<1x128xf32>
    %54 = arith.addf %50, %53 : vector<1x128xf32>
    %cst_27 = arith.constant dense<0.000000e+00> : vector<128xf32>
    %55 = vector.multi_reduction <add>, %43, %cst_27 [0] : vector<32x128xf32> to vector<128xf32>
    %56 = vector.shape_cast %55 : vector<128xf32> to vector<1x128xf32>
    %57 = arith.addf %56, %54 : vector<1x128xf32>
    %cst_28 = arith.constant 0.000000e+00 : f32
    %58 = vector.broadcast %cst_28 : f32 to vector<1x128xf32>
    %59 = arith.addf %57, %58 : vector<1x128xf32>
    %60 = vector.shape_cast %59 : vector<1x128xf32> to vector<1x1x128xf32>
    %c0_29 = arith.constant 0 : index
    %c0_30 = arith.constant 0 : index
    %c0_31 = arith.constant 0 : index
    %61 = vector.load %arg9[%c0_29, %c0_30, %c0_31] : memref<1x1x128xf32, #tpu.memory_space<vmem>>, vector<1x1x128xf32>
    tpu.vector_store %arg9[%c0_29, %c0_30, %c0_31], %60 {strides = array<i32>} : memref<1x1x128xf32, #tpu.memory_space<vmem>>, vector<1x1x128xf32>,
    return
  }
  func.func @transform_0(%arg0: i32) -> (i32, i32) {
    %c0_i32 = arith.constant 0 : i32
    %c0_i32_0 = arith.constant 0 : i32
    %c0_i32_1 = arith.constant 0 : i32
    return %c0_i32, %c0_i32_0 : i32, i32
  }
  func.func @transform_1(%arg0: i32) -> (i32, i32) {
    %c0_i32 = arith.constant 0 : i32
    %c0_i32_0 = arith.constant 0 : i32
    return %c0_i32, %arg0 : i32, i32
  }
  func.func @transform_2(%arg0: i32) -> (i32, i32) {
    %c0_i32 = arith.constant 0 : i32
    %c0_i32_0 = arith.constant 0 : i32
    return %c0_i32, %arg0 : i32, i32
  }
  func.func @transform_3(%arg0: i32) -> (i32, i32) {
    %c0_i32 = arith.constant 0 : i32
    %c0_i32_0 = arith.constant 0 : i32
    return %c0_i32, %arg0 : i32, i32
  }
  func.func @transform_4(%arg0: i32) -> (i32, i32) {
    %c0_i32 = arith.constant 0 : i32
    %c0_i32_0 = arith.constant 0 : i32
    return %c0_i32, %arg0 : i32, i32
  }
  func.func @transform_5(%arg0: i32) -> (i32, i32) {
    %c0_i32 = arith.constant 0 : i32
    %c0_i32_0 = arith.constant 0 : i32
    return %c0_i32, %arg0 : i32, i32
  }
  func.func @transform_6(%arg0: i32) -> (i32, i32) {
    %c0_i32 = arith.constant 0 : i32
    %c0_i32_0 = arith.constant 0 : i32
    return %c0_i32, %arg0 : i32, i32
  }
  func.func @transform_7(%arg0: i32) -> (i32, i32) {
    %c0_i32 = arith.constant 0 : i32
    %c0_i32_0 = arith.constant 0 : i32
    return %c0_i32, %arg0 : i32, i32
  }
  func.func @transform_8(%arg0: i32) -> (i32, i32, i32) {
    %c0_i32 = arith.constant 0 : i32
    %c0_i32_0 = arith.constant 0 : i32
    %c0_i32_1 = arith.constant 0 : i32
    return %arg0, %c0_i32, %c0_i32_0 : i32, i32, i32
  }
}

</mosaic_0001>

<llo_original>
// kernel: tpu_custom_call.1
$region0: #{tpu_custom_call.1}
  #allocation0 [shape = 'u32[]', space=smem, size = 0x4, offset = 0x4, fixed_abs, tag = 'smem constant byte address 0x4 - core index']
  #allocation1 [shape = 'u32[144,128]{1,0:T(1,128)}', space=vmem, size = 0x12000, scoped, tag = 'internal scratch']
  %s0 = inlined_call_operand.hbm [shape: f32[8,32], index: 0, kind: input, shape index: {}]
  %s1 = inlined_call_operand.hbm [shape: f32[32,256], index: 1, kind: input, shape index: {}]
  %s2 = inlined_call_operand.hbm [shape: f32[32,256], index: 2, kind: input, shape index: {}]
  %s3 = inlined_call_operand.vmem [shape: f32[1,256], index: 3, kind: input, shape index: {}]
  %s4 = inlined_call_operand.vmem [shape: f32[1,256], index: 4, kind: input, shape index: {}]
  %s5 = inlined_call_operand.hbm [shape: f32[32,256], index: 5, kind: input, shape index: {}]
  %s6 = inlined_call_operand.vmem [shape: f32[1,256], index: 6, kind: input, shape index: {}]
  %s7 = inlined_call_operand.hbm [shape: f32[8,256], index: 7, kind: output, shape index: {0}]
  %s8 = inlined_call_operand.hbm [shape: f32[2,1,128], index: 8, kind: output, shape index: {1}]
  %9 = xla_tuple %s7, %s8
  %s10 = sld [smem:[#allocation0]]
  $region85: #{tpu_custom_call.1} parent=0
    _
  %s12 = ssub.s32 1, %s10
  %s13 = scalar_select 0, %s12, %s10
  $region1: #{tpu_custom_call.1} parent=0
    #allocation2 [shape = 'u8[4096]{0}', space=vmem, size = 0x1000, scoped, tag = 'input window, operand 0, single buffered']
    #allocation3 [shape = 's32[2]{0}', space=sflag, size = 0x8, scoped, tag = 'scoped memory for tpu_custom_call.1']
    #allocation4 [shape = 's32[2]{0}', space=sflag, size = 0x8, scoped, tag = 'scoped memory for tpu_custom_call.1']
    #allocation5 [shape = 'u8[32768]{0}', space=vmem, size = 0x8000, scoped, tag = 'input window, operand 1']
    #allocation6 [shape = 's32[2]{0}', space=sflag, size = 0x8, scoped, tag = 'scoped memory for tpu_custom_call.1']
    #allocation7 [shape = 'u8[32768]{0}', space=vmem, size = 0x8000, scoped, tag = 'input window, operand 2']
    #allocation8 [shape = 'u8[32768]{0}', space=vmem, size = 0x8000, scoped, tag = 'input window, operand 5']
    #allocation9 [shape = 's32[2]{0}', space=sflag, size = 0x8, scoped, tag = 'scoped memory for tpu_custom_call.1']
    #allocation10 [shape = 'u8[8192]{0}', space=vmem, size = 0x2000, scoped, tag = 'output window, operand 0']
    #allocation11 [shape = 'u8[1024]{0}', space=vmem, size = 0x400, scoped, tag = 'output window, operand 1']
    #allocation12 [shape = 's32[2]{0}', space=sflag, size = 0x8, scoped, tag = 'scoped memory for tpu_custom_call.1']
    %14 = vsyncpa [#allocation3], 0
    %15 = vsyncpa [#allocation6], 0
    %s16 = scalar_lea.sflag [#allocation6], 1
    %17 = vsyncpa %s16, 0
    %18 = vsyncpa [#allocation9], 0
    %s19 = scalar_lea.sflag [#allocation9], 1
    %20 = vsyncpa %s19, 0
    %21 = vsyncpa [#allocation4], 0
    %s22 = scalar_lea.sflag [#allocation4], 1
    %23 = vsyncpa %s22, 0
    %24 = vsyncpa [#allocation12], 0
    %s25 = scalar_lea.sflag [#allocation12], 1
    %26 = vsyncpa %s25, 0
    loop: start=0, step=1, limit=4
    $region2: #{tpu_custom_call.1} parent=1 // loop_pre_header
      _
    $region3: #{tpu_custom_call.1} parent=1 // loop_header
      %s28 = sphi 0, %s32
      %p29 = scmp.ge.s32.totalorder %s28, 4
      %s36 = sphi 0, %s36
      %s38 = sphi 0, %s36
      %s39 = sphi 0, %s38
      %s53 = sphi 0, %s39
      %s59 = sphi 0, %s61
      %s62 = sphi 0, %s59
      %s63 = sphi 0, %s62
      %s79 = sphi 0, %s63
      %s85 = sphi 0, %s87
      %s88 = sphi 0, %s85
      %s89 = sphi 0, %s88
      %s105 = sphi 0, %s89
      %s111 = sphi 0, %s113
      %s114 = sphi 0, %s111
      %s115 = sphi 0, %s114
      %s131 = sphi 0, %s115
      %s137 = sphi 0, %s139
      %s140 = sphi 0, %s137
      %s141 = sphi 0, %s140
      %s157 = sphi 0, %s141
      %s163 = sphi 0, %s165
      %s166 = sphi 0, %s163
      %s167 = sphi 0, %s166
      %s183 = sphi 0, %s167
      %s189 = sphi 0, %s191
      %s192 = sphi 0, %s189
      %s193 = sphi 0, %s192
      %s209 = sphi 0, %s193
      %s215 = sphi 0, %s217
      %s218 = sphi 0, %s215
      %s219 = sphi 0, %s218
      %s235 = sphi 0, %s219
      %s241 = sphi 0, %s243
      %s244 = sphi 0, %s241
      %s245 = sphi 0, %s244
      %s261 = sphi 0, %s245
    $region4: #{tpu_custom_call.1} parent=1 // loop_header_branch
      %31 = sbr.rel (%p29) target = $region8
    $region5: #{tpu_custom_call.1} parent=1 // loop_body
      %s33 = ssub.s32 %s28, 1
      %s34 = ssub.s32 %s28, 2
      %s35 = sadd.s32 %s28, 1
      %s37 = sadd.s32 %s36, 1
      %p40 = scmp.eq.s32.totalorder %s28, 1
      %p41 = scmp.ne.s32.totalorder %s36, %s38
      %p42 = scmp.eq.s32.totalorder %s28, 0
      %p43 = por %p41, %p42
      %p44 = scmp.ne.s32.totalorder %s36, %s38
      %p45 = scmp.eq.s32.totalorder %s33, 1
      %p46 = por %p44, %p45
      %p47 = scmp.ne.s32.totalorder %s38, %s39
      %p48 = scmp.eq.s32.totalorder %s33, 0
      %p49 = por %p47, %p48
      %p50 = scmp.ne.s32.totalorder %s38, %s39
      %p51 = scmp.eq.s32.totalorder %s34, 1
      %p52 = por %p50, %p51
      %p54 = scmp.ne.s32.totalorder %s39, %s53
      %p55 = scmp.eq.s32.totalorder %s34, 0
      %p56 = por %p54, %p55
      %s57 = ssub.s32 %s28, %s35
      %p58 = scmp.eq.s32.totalorder %s57, 0
      %s60 = sadd.s32 %s59, 1
      %s61 = scalar_select %p58, %s59, %s60
      %p64 = pneg %p58
      %p65 = scmp.eq.s32.totalorder %s28, 1
      %p66 = por %p64, %p65
      %p67 = scmp.ne.s32.totalorder %s59, %s62
      %p68 = scmp.eq.s32.totalorder %s28, 0
      %p69 = por %p67, %p68
      %p70 = scmp.ne.s32.totalorder %s59, %s62
      %p71 = scmp.eq.s32.totalorder %s33, 1
      %p72 = por %p70, %p71
      %p73 = scmp.ne.s32.totalorder %s62, %s63
      %p74 = scmp.eq.s32.totalorder %s33, 0
      %p75 = por %p73, %p74
      %p76 = scmp.ne.s32.totalorder %s62, %s63
      %p77 = scmp.eq.s32.totalorder %s34, 1
      %p78 = por %p76, %p77
      %p80 = scmp.ne.s32.totalorder %s63, %s79
      %p81 = scmp.eq.s32.totalorder %s34, 0
      %p82 = por %p80, %p81
      %s83 = ssub.s32 %s28, %s35
      %p84 = scmp.eq.s32.totalorder %s83, 0
      %s86 = sadd.s32 %s85, 1
      %s87 = scalar_select %p84, %s85, %s86
      %p90 = pneg %p84
      %p91 = scmp.eq.s32.totalorder %s28, 1
      %p92 = por %p90, %p91
      %p93 = scmp.ne.s32.totalorder %s85, %s88
      %p94 = scmp.eq.s32.totalorder %s28, 0
      %p95 = por %p93, %p94
      %p96 = scmp.ne.s32.totalorder %s85, %s88
      %p97 = scmp.eq.s32.totalorder %s33, 1
      %p98 = por %p96, %p97
      %p99 = scmp.ne.s32.totalorder %s88, %s89
      %p100 = scmp.eq.s32.totalorder %s33, 0
      %p101 = por %p99, %p100
      %p102 = scmp.ne.s32.totalorder %s88, %s89
      %p103 = scmp.eq.s32.totalorder %s34, 1
      %p104 = por %p102, %p103
      %p106 = scmp.ne.s32.totalorder %s89, %s105
      %p107 = scmp.eq.s32.totalorder %s34, 0
      %p108 = por %p106, %p107
      %s109 = ssub.s32 %s28, %s35
      %p110 = scmp.eq.s32.totalorder %s109, 0
      %s112 = sadd.s32 %s111, 1
      %s113 = scalar_select %p110, %s111, %s112
      %p116 = pneg %p110
      %p117 = scmp.eq.s32.totalorder %s28, 1
      %p118 = por %p116, %p117
      %p119 = scmp.ne.s32.totalorder %s111, %s114
      %p120 = scmp.eq.s32.totalorder %s28, 0
      %p121 = por %p119, %p120
      %p122 = scmp.ne.s32.totalorder %s111, %s114
      %p123 = scmp.eq.s32.totalorder %s33, 1
      %p124 = por %p122, %p123
      %p125 = scmp.ne.s32.totalorder %s114, %s115
      %p126 = scmp.eq.s32.totalorder %s33, 0
      %p127 = por %p125, %p126
      %p128 = scmp.ne.s32.totalorder %s114, %s115
      %p129 = scmp.eq.s32.totalorder %s34, 1
      %p130 = por %p128, %p129
      %p132 = scmp.ne.s32.totalorder %s115, %s131
      %p133 = scmp.eq.s32.totalorder %s34, 0
      %p134 = por %p132, %p133
      %s135 = ssub.s32 %s28, %s35
      %p136 = scmp.eq.s32.totalorder %s135, 0
      %s138 = sadd.s32 %s137, 1
      %s139 = scalar_select %p136, %s137, %s138
      %p142 = pneg %p136
      %p143 = scmp.eq.s32.totalorder %s28, 1
      %p144 = por %p142, %p143
      %p145 = scmp.ne.s32.totalorder %s137, %s140
      %p146 = scmp.eq.s32.totalorder %s28, 0
      %p147 = por %p145, %p146
      %p148 = scmp.ne.s32.totalorder %s137, %s140
      %p149 = scmp.eq.s32.totalorder %s33, 1
      %p150 = por %p148, %p149
      %p151 = scmp.ne.s32.totalorder %s140, %s141
      %p152 = scmp.eq.s32.totalorder %s33, 0
      %p153 = por %p151, %p152
      %p154 = scmp.ne.s32.totalorder %s140, %s141
      %p155 = scmp.eq.s32.totalorder %s34, 1
      %p156 = por %p154, %p155
      %p158 = scmp.ne.s32.totalorder %s141, %s157
      %p159 = scmp.eq.s32.totalorder %s34, 0
      %p160 = por %p158, %p159
      %s161 = ssub.s32 %s28, %s35
      %p162 = scmp.eq.s32.totalorder %s161, 0
      %s164 = sadd.s32 %s163, 1
      %s165 = scalar_select %p162, %s163, %s164
      %p168 = pneg %p162
      %p169 = scmp.eq.s32.totalorder %s28, 1
      %p170 = por %p168, %p169
      %p171 = scmp.ne.s32.totalorder %s163, %s166
      %p172 = scmp.eq.s32.totalorder %s28, 0
      %p173 = por %p171, %p172
      %p174 = scmp.ne.s32.totalorder %s163, %s166
      %p175 = scmp.eq.s32.totalorder %s33, 1
      %p176 = por %p174, %p175
      %p177 = scmp.ne.s32.totalorder %s166, %s167
      %p178 = scmp.eq.s32.totalorder %s33, 0
      %p179 = por %p177, %p178
      %p180 = scmp.ne.s32.totalorder %s166, %s167
      %p181 = scmp.eq.s32.totalorder %s34, 1
      %p182 = por %p180, %p181
      %p184 = scmp.ne.s32.totalorder %s167, %s183
      %p185 = scmp.eq.s32.totalorder %s34, 0
      %p186 = por %p184, %p185
      %s187 = ssub.s32 %s28, %s35
      %p188 = scmp.eq.s32.totalorder %s187, 0
      %s190 = sadd.s32 %s189, 1
      %s191 = scalar_select %p188, %s189, %s190
      %p194 = pneg %p188
      %p195 = scmp.eq.s32.totalorder %s28, 1
      %p196 = por %p194, %p195
      %p197 = scmp.ne.s32.totalorder %s189, %s192
      %p198 = scmp.eq.s32.totalorder %s28, 0
      %p199 = por %p197, %p198
      %p200 = scmp.ne.s32.totalorder %s189, %s192
      %p201 = scmp.eq.s32.totalorder %s33, 1
      %p202 = por %p200, %p201
      %p203 = scmp.ne.s32.totalorder %s192, %s193
      %p204 = scmp.eq.s32.totalorder %s33, 0
      %p205 = por %p203, %p204
      %p206 = scmp.ne.s32.totalorder %s192, %s193
      %p207 = scmp.eq.s32.totalorder %s34, 1
      %p208 = por %p206, %p207
      %p210 = scmp.ne.s32.totalorder %s193, %s209
      %p211 = scmp.eq.s32.totalorder %s34, 0
      %p212 = por %p210, %p211
      %s213 = ssub.s32 %s28, %s35
      %p214 = scmp.eq.s32.totalorder %s213, 0
      %s216 = sadd.s32 %s215, 1
      %s217 = scalar_select %p214, %s215, %s216
      %p220 = pneg %p214
      %p221 = scmp.eq.s32.totalorder %s28, 1
      %p222 = por %p220, %p221
      %p223 = scmp.ne.s32.totalorder %s215, %s218
      %p224 = scmp.eq.s32.totalorder %s28, 0
      %p225 = por %p223, %p224
      %p226 = scmp.ne.s32.totalorder %s215, %s218
      %p227 = scmp.eq.s32.totalorder %s33, 1
      %p228 = por %p226, %p227
      %p229 = scmp.ne.s32.totalorder %s218, %s219
      %p230 = scmp.eq.s32.totalorder %s33, 0
      %p231 = por %p229, %p230
      %p232 = scmp.ne.s32.totalorder %s218, %s219
      %p233 = scmp.eq.s32.totalorder %s34, 1
      %p234 = por %p232, %p233
      %p236 = scmp.ne.s32.totalorder %s219, %s235
      %p237 = scmp.eq.s32.totalorder %s34, 0
      %p238 = por %p236, %p237
      %s239 = ssub.s32 %s28, %s35
      %p240 = scmp.eq.s32.totalorder %s239, 0
      %s242 = sadd.s32 %s241, 1
      %s243 = scalar_select %p240, %s241, %s242
      %p246 = pneg %p240
      %p247 = scmp.eq.s32.totalorder %s28, 1
      %p248 = por %p246, %p247
      %p249 = scmp.ne.s32.totalorder %s241, %s244
      %p250 = scmp.eq.s32.totalorder %s28, 0
      %p251 = por %p249, %p250
      %p252 = scmp.ne.s32.totalorder %s241, %s244
      %p253 = scmp.eq.s32.totalorder %s33, 1
      %p254 = por %p252, %p253
      %p255 = scmp.ne.s32.totalorder %s244, %s245
      %p256 = scmp.eq.s32.totalorder %s33, 0
      %p257 = por %p255, %p256
      %p258 = scmp.ne.s32.totalorder %s244, %s245
      %p259 = scmp.eq.s32.totalorder %s34, 1
      %p260 = por %p258, %p259
      %p262 = scmp.ne.s32.totalorder %s245, %s261
      %p263 = scmp.eq.s32.totalorder %s34, 0
      %p264 = por %p262, %p263
      %p265 = scmp.le.s32.totalorder 1, %s28
      %p266 = scmp.lt.s32.totalorder %s28, 3
      %p267 = pnand %p265, %p266
      %p268 = pneg %p267
      // Predicated region
      $region9: #{tpu_custom_call.1} parent=5 // pred_check
        _
      $region10: #{tpu_custom_call.1} parent=5 // pred_check_branch
        %270 = sbr.rel (%p267) target = $region12
      $region11: #{tpu_custom_call.1} parent=5 // pred_region
        %s271 = ssub.s32 %s28, 1
        // Predicated region
        $region13: #{tpu_custom_call.1} parent=11 // pred_check
          %p272 = pneg %p49
        $region14: #{tpu_custom_call.1} parent=11 // pred_check_branch
          %274 = sbr.rel (%p272) target = $region16
        $region15: #{tpu_custom_call.1} parent=11 // pred_region
          %s276 = ssub.s32 128, 128
          %277 = vsyncadd [#allocation3], %s276
          %s279 = sshll.u32 [#allocation2], 4
          %s280 = int_to_ptr.vmem [resolvable:$true] %s279
          %282 = dma.hbm_to_vmem [thread:$0]  %s0, 128, %s280, [#allocation3]
        $region16: #{tpu_custom_call.1} parent=11 // pred_fallthru
          _
      $region12: #{tpu_custom_call.1} parent=5 // pred_fallthru
        _
      %p283 = scmp.lt.s32.totalorder %s28, 2
      // Predicated region
      $region17: #{tpu_custom_call.1} parent=5 // pred_check
        %p284 = pneg %p283
      $region18: #{tpu_custom_call.1} parent=5 // pred_check_branch
        %286 = sbr.rel (%p284) target = $region20
      $region19: #{tpu_custom_call.1} parent=5 // pred_region
        // Predicated region
        $region21: #{tpu_custom_call.1} parent=19 // pred_check
          %p287 = pneg %p69
        $region22: #{tpu_custom_call.1} parent=19 // pred_check_branch
          %289 = sbr.rel (%p287) target = $region24
        $region23: #{tpu_custom_call.1} parent=19 // pred_region
          %s290 = sand.u32 %s28, 1
          %s291 = scalar_lea.sflag [#allocation6], %s290
          %s292 = sand.u32 %s59, 1
          %s293 = smul.addr %s292, 32
          %s294 = scalar_lea.vmem [#allocation5], %s293
          %s296 = ssub.s32 512, 512
          %297 = vsyncadd %s291, %s296
          %s298 = smul.addr %s28, 128
          %s299 = scalar_lea.hbm %s1, %s298
          %s300 = sshll.u32 %s294, 4
          %s301 = int_to_ptr.vmem [resolvable:$true] %s300
          %306 = dma.hbm_to_vmem [thread:$0]  %s299, 512, %s301, %s291, 256, 128, 8
        $region24: #{tpu_custom_call.1} parent=19 // pred_fallthru
          _
        // Predicated region
        $region25: #{tpu_custom_call.1} parent=19 // pred_check
          %p307 = pneg %p95
        $region26: #{tpu_custom_call.1} parent=19 // pred_check_branch
          %309 = sbr.rel (%p307) target = $region28
        $region27: #{tpu_custom_call.1} parent=19 // pred_region
          %s310 = sand.u32 %s28, 1
          %s311 = scalar_lea.sflag [#allocation6], %s310
          %s312 = sand.u32 %s85, 1
          %s313 = smul.addr %s312, 32
          %s314 = scalar_lea.vmem [#allocation7], %s313
          %s316 = ssub.s32 512, 512
          %317 = vsyncadd %s311, %s316
          %s318 = smul.addr %s28, 128
          %s319 = scalar_lea.hbm %s2, %s318
          %s320 = sshll.u32 %s314, 4
          %s321 = int_to_ptr.vmem [resolvable:$true] %s320
          %326 = dma.hbm_to_vmem [thread:$0]  %s319, 512, %s321, %s311, 256, 128, 8
        $region28: #{tpu_custom_call.1} parent=19 // pred_fallthru
          _
        // Predicated region
        $region29: #{tpu_custom_call.1} parent=19 // pred_check
          %p327 = pneg %p121
        $region30: #{tpu_custom_call.1} parent=19 // pred_check_branch
          %329 = sbr.rel (%p327) target = $region32
        $region31: #{tpu_custom_call.1} parent=19 // pred_region
          %p330 = scmp.lt.s32.totalorder %s28, 1
          %s331 = scalar_select %p330, %s28, 1
          %s332 = scalar_lea.vmem %s3, %s331
        $region32: #{tpu_custom_call.1} parent=19 // pred_fallthru
          _
        // Predicated region
        $region33: #{tpu_custom_call.1} parent=19 // pred_check
          %p333 = pneg %p147
        $region34: #{tpu_custom_call.1} parent=19 // pred_check_branch
          %335 = sbr.rel (%p333) target = $region36
        $region35: #{tpu_custom_call.1} parent=19 // pred_region
          %p336 = scmp.lt.s32.totalorder %s28, 1
          %s337 = scalar_select %p336, %s28, 1
          %s338 = scalar_lea.vmem %s4, %s337
        $region36: #{tpu_custom_call.1} parent=19 // pred_fallthru
          _
        // Predicated region
        $region37: #{tpu_custom_call.1} parent=19 // pred_check
          %p339 = pneg %p173
        $region38: #{tpu_custom_call.1} parent=19 // pred_check_branch
          %341 = sbr.rel (%p339) target = $region40
        $region39: #{tpu_custom_call.1} parent=19 // pred_region
          %s342 = sand.u32 %s163, 1
          %s343 = scalar_lea.sflag [#allocation9], %s342
          %s344 = sand.u32 %s163, 1
          %s345 = smul.addr %s344, 32
          %s346 = scalar_lea.vmem [#allocation8], %s345
          %s348 = ssub.s32 512, 512
          %349 = vsyncadd %s343, %s348
          %s350 = smul.addr %s28, 128
          %s351 = scalar_lea.hbm %s5, %s350
          %s352 = sshll.u32 %s346, 4
          %s353 = int_to_ptr.vmem [resolvable:$true] %s352
          %358 = dma.hbm_to_vmem [thread:$0]  %s351, 512, %s353, %s343, 256, 128, 8
        $region40: #{tpu_custom_call.1} parent=19 // pred_fallthru
          _
        // Predicated region
        $region41: #{tpu_custom_call.1} parent=19 // pred_check
          %p359 = pneg %p199
        $region42: #{tpu_custom_call.1} parent=19 // pred_check_branch
          %361 = sbr.rel (%p359) target = $region44
        $region43: #{tpu_custom_call.1} parent=19 // pred_region
          %p362 = scmp.lt.s32.totalorder %s28, 1
          %s363 = scalar_select %p362, %s28, 1
          %s364 = scalar_lea.vmem %s6, %s363
        $region44: #{tpu_custom_call.1} parent=19 // pred_fallthru
          _
      $region20: #{tpu_custom_call.1} parent=5 // pred_fallthru
        _
      %p365 = scmp.le.s32.totalorder 1, %s28
      %p366 = scmp.lt.s32.totalorder %s28, 3
      %p367 = pnand %p365, %p366
      %p368 = pneg %p367
      // Predicated region
      $region45: #{tpu_custom_call.1} parent=5 // pred_check
        _
      $region46: #{tpu_custom_call.1} parent=5 // pred_check_branch
        %370 = sbr.rel (%p367) target = $region48
      $region47: #{tpu_custom_call.1} parent=5 // pred_region
        %s371 = ssub.s32 %s28, 1
        // Predicated region
        $region49: #{tpu_custom_call.1} parent=47 // pred_check
          %p372 = pneg %p49
        $region50: #{tpu_custom_call.1} parent=47 // pred_check_branch
          %374 = sbr.rel (%p372) target = $region52
        $region51: #{tpu_custom_call.1} parent=47 // pred_region
          %375 = dma.done [#allocation3], 128
        $region52: #{tpu_custom_call.1} parent=47 // pred_fallthru
          _
        %s376 = sand.u32 %s33, 1
        %s377 = scalar_lea.sflag [#allocation6], %s376
        %s378 = sand.u32 %s62, 1
        %s379 = smul.addr %s378, 32
        %s380 = scalar_lea.vmem [#allocation5], %s379
        // Predicated region
        $region53: #{tpu_custom_call.1} parent=47 // pred_check
          %p381 = pneg %p75
        $region54: #{tpu_custom_call.1} parent=47 // pred_check_branch
          %383 = sbr.rel (%p381) target = $region56
        $region55: #{tpu_custom_call.1} parent=47 // pred_region
          %384 = dma.done %s377, 512
        $region56: #{tpu_custom_call.1} parent=47 // pred_fallthru
          _
        %s385 = sand.u32 %s33, 1
        %s386 = scalar_lea.sflag [#allocation6], %s385
        %s387 = sand.u32 %s88, 1
        %s388 = smul.addr %s387, 32
        %s389 = scalar_lea.vmem [#allocation7], %s388
        // Predicated region
        $region57: #{tpu_custom_call.1} parent=47 // pred_check
          %p390 = pneg %p101
        $region58: #{tpu_custom_call.1} parent=47 // pred_check_branch
          %392 = sbr.rel (%p390) target = $region60
        $region59: #{tpu_custom_call.1} parent=47 // pred_region
          %393 = dma.done %s386, 512
        $region60: #{tpu_custom_call.1} parent=47 // pred_fallthru
          _
        %s394 = sand.u32 %s166, 1
        %s395 = scalar_lea.sflag [#allocation9], %s394
        %s396 = sand.u32 %s166, 1
        %s397 = smul.addr %s396, 32
        %s398 = scalar_lea.vmem [#allocation8], %s397
        // Predicated region
        $region61: #{tpu_custom_call.1} parent=47 // pred_check
          %p399 = pneg %p179
        $region62: #{tpu_custom_call.1} parent=47 // pred_check_branch
          %401 = sbr.rel (%p399) target = $region64
        $region63: #{tpu_custom_call.1} parent=47 // pred_region
          %402 = dma.done %s395, 512
        $region64: #{tpu_custom_call.1} parent=47 // pred_fallthru
          _
        %p403 = pneg %p49
        %p404 = pneg %p46
        %s405 = sand.u32 %s33, 1
        %s406 = scalar_lea.sflag [#allocation6], %s405
        %s407 = sand.u32 %s62, 1
        %s408 = smul.addr %s407, 32
        %s409 = scalar_lea.vmem [#allocation5], %s408
        %p410 = pneg %p75
        %p411 = pneg %p72
        %s412 = sand.u32 %s33, 1
        %s413 = scalar_lea.sflag [#allocation6], %s412
        %s414 = sand.u32 %s88, 1
        %s415 = smul.addr %s414, 32
        %s416 = scalar_lea.vmem [#allocation7], %s415
        %p417 = pneg %p101
        %p418 = pneg %p98
        %p419 = scmp.lt.s32.totalorder %s33, 1
        %s420 = scalar_select %p419, %s33, 1
        %s421 = scalar_lea.vmem %s3, %s420
        %p422 = pneg %p127
        %p423 = pneg %p124
        %p424 = scmp.lt.s32.totalorder %s33, 1
        %s425 = scalar_select %p424, %s33, 1
        %s426 = scalar_lea.vmem %s4, %s425
        %p427 = pneg %p153
        %p428 = pneg %p150
        %s429 = sand.u32 %s166, 1
        %s430 = scalar_lea.sflag [#allocation9], %s429
        %s431 = sand.u32 %s166, 1
        %s432 = smul.addr %s431, 32
        %s433 = scalar_lea.vmem [#allocation8], %s432
        %p434 = pneg %p179
        %p435 = pneg %p176
        %p436 = scmp.lt.s32.totalorder %s33, 1
        %s437 = scalar_select %p436, %s33, 1
        %s438 = scalar_lea.vmem %s6, %s437
        %p439 = pneg %p205
        %p440 = pneg %p202
        %p441 = pneg %p231
        %p442 = pneg %p228
        %s443 = sand.u32 %s218, 1
        %s444 = scalar_lea.sflag [#allocation4], %s443
        %s445 = sand.u32 %s218, 1
        %s446 = smul.addr %s445, 8
        %s447 = scalar_lea.vmem [#allocation10], %s446
        %p448 = pneg %p257
        %p449 = pneg %p254
        %s450 = sand.u32 %s244, 1
        %s451 = scalar_lea.sflag [#allocation12], %s450
        %s452 = sand.u32 %s244, 1
        %s453 = scalar_lea.vmem [#allocation11], %s452
        %p454 = scmp.lt.s32.totalorder %s33, 1
        %s455 = scalar_select %p454, %s33, 1
        %s456 = scalar_lea.vmem %s3, %s455
        %p457 = scmp.lt.s32.totalorder %s33, 1
        %s458 = scalar_select %p457, %s33, 1
        %s459 = scalar_lea.vmem %s4, %s458
        %p460 = scmp.lt.s32.totalorder %s33, 1
        %s461 = scalar_select %p460, %s33, 1
        %s462 = scalar_lea.vmem %s6, %s461
        %v463 = vld [vmem:[#allocation2] sm:$0xff]
        %v464 = vld [vmem:[%s380] sm:$0xff]
        %v465 = vld [vmem:[%s380 + $0x8] sm:$0xff]
        %v466 = vld [vmem:[%s380 + $0x10] sm:$0xff]
        %v467 = vld [vmem:[%s380 + $0x18] sm:$0xff]
        %v468 = vld [vmem:[%s389] sm:$0xff]
        %v469 = vld [vmem:[%s389 + $0x8] sm:$0xff]
        %v470 = vld [vmem:[%s389 + $0x10] sm:$0xff]
        %v471 = vld [vmem:[%s389 + $0x18] sm:$0xff]
        %v472 = vld [vmem:[%s456] sm:$0x1]
        %v473 = vld [vmem:[%s459] sm:$0x1]
        %v474 = vld [vmem:[%s398] sm:$0xff]
        %v475 = vld [vmem:[%s398 + $0x8] sm:$0xff]
        %v476 = vld [vmem:[%s398 + $0x10] sm:$0xff]
        %v477 = vld [vmem:[%s398 + $0x18] sm:$0xff]
        %v478 = vld [vmem:[%s462] sm:$0x1]
        %vm479 = vcmp.gt.f32.partialorder %v468, 20.0
        %vm480 = vcmp.gt.f32.partialorder %v469, 20.0
        %vm481 = vcmp.gt.f32.partialorder %v470, 20.0
        %vm482 = vcmp.gt.f32.partialorder %v471, 20.0
        %v483 = vmin.f32 %v468, 20.0
        %v484 = vmin.f32 %v469, 20.0
        %v485 = vmin.f32 %v470, 20.0
        %v486 = vmin.f32 %v471, 20.0
        %v487 = vmul.f32 %v483, 1.442695
        %v488 = vpow.pop %v487
        %v489 = vmul.f32 %v484, 1.442695
        %v490 = vpow.pop %v489
        %v491 = vmul.f32 %v485, 1.442695
        %v492 = vpow.pop %v491
        %v493 = vmul.f32 %v486, 1.442695
        %v494 = vpow.pop %v493
        %v495 = vadd.f32 %v488, 1.0
        %v496 = vlog2.pop %v495
        %v497 = vmul.f32 %v496, 0.6931472
        %v498 = vmul.f32 -0.5, %v488
        %v499 = vadd.f32 %v498, 1.0
        %v500 = vmul.f32 %v499, %v488
        %v501 = vand.u32 2147483647, %v488
        %vm502 = vcmp.lt.f32.partialorder %v501, 0.0004427343
        %v503 = vsel %vm502, %v500, %v497
        %v504 = vadd.f32 %v490, 1.0
        %v505 = vlog2.pop %v504
        %v506 = vmul.f32 %v505, 0.6931472
        %v507 = vmul.f32 -0.5, %v490
        %v508 = vadd.f32 %v507, 1.0
        %v509 = vmul.f32 %v508, %v490
        %v510 = vand.u32 2147483647, %v490
        %vm511 = vcmp.lt.f32.partialorder %v510, 0.0004427343
        %v512 = vsel %vm511, %v509, %v506
        %v513 = vadd.f32 %v492, 1.0
        %v514 = vlog2.pop %v513
        %v515 = vmul.f32 %v514, 0.6931472
        %v516 = vmul.f32 -0.5, %v492
        %v517 = vadd.f32 %v516, 1.0
        %v518 = vmul.f32 %v517, %v492
        %v519 = vand.u32 2147483647, %v492
        %vm520 = vcmp.lt.f32.partialorder %v519, 0.0004427343
        %v521 = vsel %vm520, %v518, %v515
        %v522 = vadd.f32 %v494, 1.0
        %v523 = vlog2.pop %v522
        %v524 = vmul.f32 %v523, 0.6931472
        %v525 = vmul.f32 -0.5, %v494
        %v526 = vadd.f32 %v525, 1.0
        %v527 = vmul.f32 %v526, %v494
        %v528 = vand.u32 2147483647, %v494
        %vm529 = vcmp.lt.f32.partialorder %v528, 0.0004427343
        %v530 = vsel %vm529, %v527, %v524
        %v531 = vsel %vm479, %v468, %v503
        %v532 = vsel %vm480, %v469, %v512
        %v533 = vsel %vm481, %v470, %v521
        %v534 = vsel %vm482, %v471, %v530
        %v535 = vadd.f32 %v531, 1e-06
        %v536 = vadd.f32 %v532, 1e-06
        %v537 = vadd.f32 %v533, 1e-06
        %v538 = vadd.f32 %v534, 1e-06
        %vm539 = vcmp.gt.f32.partialorder %v473, 20.0
        %v540 = vmin.f32 %v473, 20.0
        %v541 = vmul.f32 %v540, 1.442695
        %v542 = vpow.pop %v541
        %v543 = vadd.f32 %v542, 1.0
        %v544 = vlog2.pop %v543
        %v545 = vmul.f32 %v544, 0.6931472
        %v546 = vmul.f32 -0.5, %v542
        %v547 = vadd.f32 %v546, 1.0
        %v548 = vmul.f32 %v547, %v542
        %v549 = vand.u32 2147483647, %v542
        %vm550 = vcmp.lt.f32.partialorder %v549, 0.0004427343
        %v551 = vsel %vm550, %v548, %v545
        %v552 = vsel %vm539, %v473, %v551
        %v553 = vadd.f32 %v552, 1e-06
        %v554 = vmul.f32 %v535, %v474
        %v555 = vmul.f32 %v536, %v475
        %v556 = vmul.f32 %v537, %v476
        %v557 = vmul.f32 %v538, %v477
        %v558 = vadd.f32 %v464, %v554
        %v559 = vadd.f32 %v465, %v555
        %v560 = vadd.f32 %v466, %v556
        %v561 = vadd.f32 %v467, %v557
        %v562 = vmul.f32 %v553, %v478
        %v563 = vadd.f32 %v472, %v562
        %v565 = vlaneseq
        %v566 = vshrl.u32 %v565, 7
        %v567 = vsub.s32 0, %v566
        %v568 = vrot.slane %v563, %v567
        %vm570 = vcmask 261120
        %v572 = vsel %vm570, %v463, 0
        %574 = vmatprep.subr.mxu0 0.0
        %575 = vmatpush1.msra.mxu0 %v558
        %576 = vmatprep.subr.mxu0 0.0
        %577 = vmatpush1.msra.mxu0 %v559
        %578 = vmatprep.subr.mxu0 0.0
        %579 = vmatpush1.msra.mxu0 %v560
        %580 = vmatprep.subr.mxu0 0.0
        %581 = vmatpush1.msra.mxu0 %v561
        %582 = vmatprep.subr.mxu0 0.0
        %583 = vmatpush1.msra.mxu0 0.0
        %584 = vmatprep.subr.mxu0 0.0
        %585 = vmatpush1.msra.mxu0 0.0
        %586 = vmatprep.subr.mxu0 0.0
        %587 = vmatpush1.msra.mxu0 0.0
        %588 = vmatprep.subr.mxu0 0.0
        %589 = vmatpush1.msra.mxu0 0.0
        %590 = vmatprep.subr.mxu0 0.0
        %591 = vmatpush1.msra.mxu0 0.0
        %592 = vmatprep.subr.mxu0 0.0
        %593 = vmatpush1.msra.mxu0 0.0
        %594 = vmatprep.subr.mxu0 0.0
        %595 = vmatpush1.msra.mxu0 0.0
        %596 = vmatprep.subr.mxu0 0.0
        %597 = vmatpush1.msra.mxu0 0.0
        %598 = vmatprep.subr.mxu0 0.0
        %599 = vmatpush1.msra.mxu0 0.0
        %600 = vmatprep.subr.mxu0 0.0
        %601 = vmatpush1.msra.mxu0 0.0
        %602 = vmatprep.subr.mxu0 0.0
        %603 = vmatpush1.msra.mxu0 0.0
        %604 = vmatprep.subr.mxu0 0.0
        %605 = vmatpush1.msra.mxu0 0.0
        %606 = vmatprep.subr.mxu0 0.0
        %607 = vmatpush1.msra.mxu0 0.0
        %608 = vmatprep.subr.mxu0 0.0
        %609 = vmatpush1.msra.mxu0 0.0
        %610 = vmatprep.subr.mxu0 0.0
        %611 = vmatpush1.msra.mxu0 0.0
        %612 = vmatprep.subr.mxu0 0.0
        %613 = vmatpush1.msra.mxu0 0.0
        %614 = vmatprep.subr.mxu0 0.0
        %615 = vmatpush1.msra.mxu0 0.0
        %616 = vmatprep.subr.mxu0 0.0
        %617 = vmatpush1.msra.mxu0 0.0
        %618 = vmatprep.subr.mxu0 0.0
        %619 = vmatpush1.msra.mxu0 0.0
        %620 = vmatprep.subr.mxu0 0.0
        %621 = vmatpush1.msra.mxu0 0.0
        %622 = vmatprep.subr.mxu0 0.0
        %623 = vmatpush1.msra.mxu0 0.0
        %624 = vmatprep.subr.mxu0 0.0
        %625 = vmatpush1.msra.mxu0 0.0
        %626 = vmatprep.subr.mxu0 0.0
        %627 = vmatpush1.msra.mxu0 0.0
        %628 = vmatprep.subr.mxu0 0.0
        %629 = vmatpush1.msra.mxu0 0.0
        %630 = vmatprep.subr.mxu0 0.0
        %631 = vmatpush1.msra.mxu0 0.0
        %632 = vmatprep.subr.mxu0 0.0
        %633 = vmatpush1.msra.mxu0 0.0
        %634 = vmatprep.subr.mxu0 0.0
        %635 = vmatpush1.msra.mxu0 0.0
        %636 = vmatprep.subr.mxu0 0.0
        %637 = vmatpush1.msra.mxu0 0.0
        %638 = vmatprep.mubr.f32.mxu0 0.0
        %639 = vmatmul.mubr.f32.gmra.mrb[0].mxu0 %v572
        %v640 = vpop.f32.mrb[0].mxu0
        %v641 = vadd.f32 %v568, %v640
        %v642 = vpop.f32.mrb[0].mxu0
        %643 = vdwg.mxu0
        %644 = vst [vmem:[%s447] sm:$0xff] %v641
        %v645 = vlog2.pop %v535
        %v646 = vmul.f32 %v645, 0.6931472
        %v647 = vlog2.pop %v536
        %v648 = vmul.f32 %v647, 0.6931472
        %v649 = vlog2.pop %v537
        %v650 = vmul.f32 %v649, 0.6931472
        %v651 = vlog2.pop %v538
        %v652 = vmul.f32 %v651, 0.6931472
        %v653 = vsub.f32 0.0, %v646
        %v654 = vsub.f32 0.0, %v648
        %v655 = vsub.f32 0.0, %v650
        %v656 = vsub.f32 0.0, %v652
        %v657 = vmul.f32 %v474, %v474
        %v658 = vmul.f32 %v475, %v475
        %v659 = vmul.f32 %v476, %v476
        %v660 = vmul.f32 %v477, %v477
        %v661 = vmul.f32 %v657, 0.5
        %v662 = vmul.f32 %v658, 0.5
        %v663 = vmul.f32 %v659, 0.5
        %v664 = vmul.f32 %v660, 0.5
        %v665 = vsub.f32 %v653, %v661
        %v666 = vsub.f32 %v654, %v662
        %v667 = vsub.f32 %v655, %v663
        %v668 = vsub.f32 %v656, %v664
        %v669 = vmul.f32 %v558, %v558
        %v670 = vmul.f32 %v559, %v559
        %v671 = vmul.f32 %v560, %v560
        %v672 = vmul.f32 %v561, %v561
        %v673 = vmul.f32 %v669, 0.5
        %v674 = vmul.f32 %v670, 0.5
        %v675 = vmul.f32 %v671, 0.5
        %v676 = vmul.f32 %v672, 0.5
        %v677 = vadd.f32 %v665, %v673
        %v678 = vadd.f32 %v666, %v674
        %v679 = vadd.f32 %v667, %v675
        %v680 = vadd.f32 %v668, %v676
        %v681 = vlog2.pop %v553
        %v682 = vmul.f32 %v681, 0.6931472
        %v683 = vsub.f32 0.0, %v682
        %v684 = vmul.f32 %v478, %v478
        %v685 = vmul.f32 %v684, 0.5
        %v686 = vsub.f32 %v683, %v685
        %v687 = vmul.f32 %v563, %v563
        %v688 = vmul.f32 %v687, 0.5
        %v689 = vadd.f32 %v686, %v688
        %v690 = vadd.f32 %v677, %v678
        %v691 = vadd.f32 %v690, %v679
        %v692 = vadd.f32 %v691, %v680
        %v693 = vrot.slane %v692, 4
        %v694 = vadd.f32 %v692, %v693
        %v695 = vrot.slane %v694, 2
        %v696 = vadd.f32 %v694, %v695
        %v697 = vrot.slane %v696, 1
        %v698 = vadd.f32 %v696, %v697
        %v699 = vadd.f32 %v698, %v689
        %v700 = vadd.f32 %v699, 0.0
        %701 = vst [vmem:[%s453] sm:$0x1] %v700
        %s702 = sand.u32 %s218, 1
        %s703 = scalar_lea.sflag [#allocation4], %s702
        %s704 = sand.u32 %s218, 1
        %s705 = smul.addr %s704, 8
        %s706 = scalar_lea.vmem [#allocation10], %s705
        %s707 = sand.u32 %s244, 1
        %s708 = scalar_lea.sflag [#allocation12], %s707
        %s709 = sand.u32 %s244, 1
        %s710 = scalar_lea.vmem [#allocation11], %s709
        // Predicated region
        $region65: #{tpu_custom_call.1} parent=47 // pred_check
          %p711 = pneg %p228
        $region66: #{tpu_custom_call.1} parent=47 // pred_check_branch
          %713 = sbr.rel (%p711) target = $region68
        $region67: #{tpu_custom_call.1} parent=47 // pred_region
          %s715 = ssub.s32 128, 128
          %716 = vsyncadd %s703, %s715
          %s717 = smul.addr %s33, 128
          %s718 = scalar_lea.hbm %s7, %s717
          %s720 = sshll.u32 %s706, 4
          %s721 = int_to_ptr.vmem [resolvable:$true] %s720
          %723 = dma.vmem_to_hbm [thread:$0]  %s721, 128, %s718, %s703
        $region68: #{tpu_custom_call.1} parent=47 // pred_fallthru
          _
        // Predicated region
        $region69: #{tpu_custom_call.1} parent=47 // pred_check
          %p724 = pneg %p254
        $region70: #{tpu_custom_call.1} parent=47 // pred_check_branch
          %726 = sbr.rel (%p724) target = $region72
        $region71: #{tpu_custom_call.1} parent=47 // pred_region
          %s728 = ssub.s32 16, 16
          %729 = vsyncadd %s708, %s728
          %s730 = smul.addr %s33, 16
          %s731 = scalar_lea.hbm %s8, %s730
          %s733 = sshll.u32 %s710, 4
          %s734 = int_to_ptr.vmem [resolvable:$true] %s733
          %736 = dma.vmem_to_hbm [thread:$0]  %s734, 16, %s731, %s708
        $region72: #{tpu_custom_call.1} parent=47 // pred_fallthru
          _
      $region48: #{tpu_custom_call.1} parent=5 // pred_fallthru
        _
      %p737 = scmp.le.s32.totalorder 2, %s28
      // Predicated region
      $region73: #{tpu_custom_call.1} parent=5 // pred_check
        %p738 = pneg %p737
      $region74: #{tpu_custom_call.1} parent=5 // pred_check_branch
        %740 = sbr.rel (%p738) target = $region76
      $region75: #{tpu_custom_call.1} parent=5 // pred_region
        %s741 = ssub.s32 %s28, 2
        // Predicated region
        $region77: #{tpu_custom_call.1} parent=75 // pred_check
          %p742 = pneg %p234
        $region78: #{tpu_custom_call.1} parent=75 // pred_check_branch
          %744 = sbr.rel (%p742) target = $region80
        $region79: #{tpu_custom_call.1} parent=75 // pred_region
          %s745 = sand.u32 %s219, 1
          %s746 = scalar_lea.sflag [#allocation4], %s745
          %s747 = sand.u32 %s219, 1
          %s748 = smul.addr %s747, 8
          %s749 = scalar_lea.vmem [#allocation10], %s748
          %750 = dma.done %s746, 128
        $region80: #{tpu_custom_call.1} parent=75 // pred_fallthru
          _
        // Predicated region
        $region81: #{tpu_custom_call.1} parent=75 // pred_check
          %p751 = pneg %p260
        $region82: #{tpu_custom_call.1} parent=75 // pred_check_branch
          %753 = sbr.rel (%p751) target = $region84
        $region83: #{tpu_custom_call.1} parent=75 // pred_region
          %s754 = sand.u32 %s245, 1
          %s755 = scalar_lea.sflag [#allocation12], %s754
          %s756 = sand.u32 %s245, 1
          %s757 = scalar_lea.vmem [#allocation11], %s756
          %758 = dma.done %s755, 16
        $region84: #{tpu_custom_call.1} parent=75 // pred_fallthru
          _
      $region76: #{tpu_custom_call.1} parent=5 // pred_fallthru
        _
    $region6: #{tpu_custom_call.1} parent=1 // loop_footer
      %s32 = sadd.s32 1, %s28
    $region7: #{tpu_custom_call.1} parent=1 // loop_footer_branch
      %27 = sbr.rel target = $region3
    $region8: #{tpu_custom_call.1} parent=1 // loop_exit
      _
    %759 = vsyncpa [#allocation3], 1
    %s760 = scalar_lea.sflag [#allocation3], 1
    %761 = vsyncpa %s760, 1
    %762 = vsyncpa [#allocation6], 1
    %s763 = scalar_lea.sflag [#allocation6], 1
    %764 = vsyncpa %s763, 1
    %765 = vsyncpa [#allocation9], 1
    %s766 = scalar_lea.sflag [#allocation9], 1
    %767 = vsyncpa %s766, 1
    %768 = vsyncpa [#allocation4], 1
    %s769 = scalar_lea.sflag [#allocation4], 1
    %770 = vsyncpa %s769, 1
    %771 = vsyncpa [#allocation12], 1
    %s772 = scalar_lea.sflag [#allocation12], 1
    %773 = vsyncpa %s772, 1

</llo_original>
